<compile_context>
chip_gen: v5e
topology: v5e:2x2
jax: 0.10.0
libtpu: 0.0.40
codegen_flags: <defaults>
</compile_context>

<pallas_src>
import numpy as np
import jax
import jax.numpy as jnp
from jax.experimental import pallas as pl
from jax.experimental.pallas import tpu as pltpu

EPS = 1e-5      # GroupNorm eps from get_norm('group', ...)
_LANE = 128


def _num_groups(ch: int) -> int:
    g = min(ch // 4, 32)
    g = max(g, 1)
    while ch % g != 0:
        g -= 1
    return g


def _gn_film_silu_kernel(a_ref, s_ref, x_ref, o_ref):
    """GroupNorm(affine=False) + FiLM + SiLU on one (Gt, Cg, rpc, 128) block.

    a_ref: (1, Gt, Cg, 1, 1) f32, per-channel (1 + scale)
    s_ref: (1, Gt, Cg, 1, 1) f32, per-channel shift
    x_ref: (1, Gt, Cg, rpc, 128)
    o_ref: (1, Gt, Cg, rpc, 128)
    """
    _, gt, cg, rpc, lane = x_ref.shape
    inv_n = 1.0 / float(cg * rpc * lane)

    # ---- Pass 1: per-group statistics (one traversal, f32 accumulation). ----
    # Reduce leading (channel) + sublane axes first (pure VPU vreg adds), then a
    # single cross-lane reduce per group.
    xf = x_ref[0].astype(jnp.float32)                         # (Gt, Cg, rpc, 128)
    p1 = jnp.sum(xf, axis=(1, 2), keepdims=True)              # (Gt, 1, 1, 128)
    p2 = jnp.sum(xf * xf, axis=(1, 2), keepdims=True)
    s1 = jnp.sum(p1, axis=3, keepdims=True)                   # (Gt, 1, 1, 1)
    s2 = jnp.sum(p2, axis=3, keepdims=True)

    mean = s1 * inv_n
    var = jnp.maximum(s2 * inv_n - mean * mean, 0.0)
    rstd = jax.lax.rsqrt(var + EPS)                           # EUP

    # (x - mean)*rstd*(1+scale) + shift  ==  a*x + b with per-channel a, b.
    a = rstd * a_ref[0].astype(jnp.float32)                   # (Gt, Cg, 1, 1)
    b = s_ref[0].astype(jnp.float32) - mean * a               # (Gt, Cg, 1, 1)

    # ---- Pass 2: normalize + FiLM + SiLU (independent read -> streamed upcast). ----
    y = x_ref[0].astype(jnp.float32) * a + b
    o_ref[0] = jax.nn.silu(y).astype(o_ref.dtype)             # act = SiLU


def get_act_norm_forward(x, emb, dense_w, dense_b, *,
                         target_block_bytes=4 << 20, min_grid_steps=8):
    """x: (B,C,H,W) NCHW; emb: (B,E); dense_w: (2C,E) torch Linear layout; dense_b: (2C,)."""
    B, C, H, W = x.shape
    two_c = dense_w.shape[0]
    assert two_c == 2 * C
    HW = H * W
    # TODO(synk): spatial sizes with H*W % 128 != 0 (8x8 / 4x4 UNet stages) need a
    # padded / lane-masked variant.
    assert HW % _LANE == 0, "H*W must be a multiple of 128"

    # ---- Dense_0(silu(emb)) in plain JAX (tiny matmul; not worth a kernel launch) ----
    h = jax.nn.silu(emb.astype(jnp.float32))
    emb_out = jax.lax.dot_general(
        h, dense_w.astype(jnp.float32),
        dimension_numbers=(((1,), (1,)), ((), ())),
        preferred_element_type=jnp.float32,
    ) + dense_b.astype(jnp.float32)[None, :]                  # (B, 2C)
    scale, shift = emb_out[:, :C], emb_out[:, C:]             # torch.chunk(emb_out, 2, dim=1)

    # ---- Layout: (B, C, H, W) -> (B, G, Cg, rpc, 128) ----
    G = _num_groups(C)
    Cg = C // G
    rpc = HW // _LANE                 # 128-lane rows per channel
    x_r = x.reshape(B, G, Cg, rpc, _LANE)

    # Per-channel FiLM coefficients (no per-row expansion, no lane-sparse last dim).
    a_ch = (1.0 + scale).reshape(B, G, Cg, 1, 1)              # f32
    s_ch = shift.reshape(B, G, Cg, 1, 1)                      # f32

    # ---- Block / VMEM budgeting ----
    rpc_pad = (-(-rpc // 8)) * 8                              # sublane padding of x block
    x_group_vmem = Cg * rpc_pad * _LANE * x.dtype.itemsize    # per group, per buffer
    ss_group_vmem = Cg * 8 * _LANE * 4                        # per side array, per group/buffer

    try:
        phys_vmem = int(pltpu.get_tpu_info().vmem_capacity_bytes)
    except Exception:
        phys_vmem = 64 << 20
    # 128 MiB parts (v5e/v6e): cap at 64 MiB; 64 MiB parts (v7x per-TC): ~3/4 of physical.
    vmem_cap = (64 << 20) if phys_vmem >= (100 << 20) else max((phys_vmem * 3) // 4, 24 << 20)

    def _vmem_need(gt):
        # x in + out double-buffered, plus the two tiny per-channel side inputs + headroom.
        return 4 * gt * x_group_vmem + 4 * gt * ss_group_vmem + (4 << 20)

    # Pack groups per block up to ~target_block_bytes ...
    Gt = int(max(1, min(G, target_block_bytes // max(x_group_vmem, 1))))
    while G % Gt != 0:
        Gt -= 1
    # ... but keep >= min_grid_steps grid steps (2 TCs x ~4 pipelined steps on v7x)
    # and stay inside the generation-aware VMEM cap.
    while Gt > 1 and (B * (G // Gt) < min_grid_steps or _vmem_need(Gt) > vmem_cap):
        Gt -= 1
        while G % Gt != 0:
            Gt -= 1

    vmem_need = _vmem_need(Gt)
    if vmem_need > vmem_cap:
        # TODO(synk): a single group larger than the VMEM budget (e.g. 1024^2 images)
        # needs a spatially split two-pass variant with carried statistics.
        raise ValueError("get_act_norm_forward: single GroupNorm group exceeds VMEM budget")
    vmem_limit = int(max(vmem_need, 16 << 20))                # never clamp below the need

    # TODO(synk): very low-res layers could additionally pack a batch sub-tile per block
    # (block (Bt, Gt, ...)) to further amortize per-step overhead; not needed at these sizes.

    out = pl.pallas_call(
        _gn_film_silu_kernel,
        out_shape=jax.ShapeDtypeStruct((B, G, Cg, rpc, _LANE), x.dtype),
        grid=(B, G // Gt),
        in_specs=[
            pl.BlockSpec((1, Gt, Cg, 1, 1), lambda b, g: (b, g, 0, 0, 0)),
            pl.BlockSpec((1, Gt, Cg, 1, 1), lambda b, g: (b, g, 0, 0, 0)),
            pl.BlockSpec((1, Gt, Cg, rpc, _LANE), lambda b, g: (b, g, 0, 0, 0)),
        ],
        out_specs=pl.BlockSpec((1, Gt, Cg, rpc, _LANE), lambda b, g: (b, g, 0, 0, 0)),
        compiler_params=pltpu.CompilerParams(
            dimension_semantics=("parallel", "parallel"),
            vmem_limit_bytes=vmem_limit,
        ),
    )(a_ch, s_ch, x_r)

    return out.reshape(B, C, H, W)


def _reference_forward(x, emb, dense_w, dense_b):
    """Pure-JAX reference mirroring the PyTorch module."""
    B, C, H, W = x.shape
    h = jax.nn.silu(emb)
    eo = h @ dense_w.T + dense_b
    scale = eo[:, :C][:, :, None, None]
    shift = eo[:, C:][:, :, None, None]
    G = _num_groups(C)
    xg = x.reshape(B, G, -1)
    mean = xg.mean(-1, keepdims=True)
    var = ((xg - mean) ** 2).mean(-1, keepdims=True)
    xn = ((xg - mean) / jnp.sqrt(var + EPS)).reshape(B, C, H, W)
    y = xn * (1.0 + scale) + shift
    return jax.nn.silu(y)


if __name__ == "__main__":
    # Small shapes consistent with the module: batch=2, channels=4, spatial=16, emb_dim=32.
    B, C, H, W = 2, 4, 16, 16
    emb_dim = 32

    key = jax.random.PRNGKey(0)
    kx, ke, kw = jax.random.split(key, 3)
    x = jax.random.normal(kx, (B, C, H, W), jnp.float32)
    emb = jax.random.normal(ke, (B, emb_dim), jnp.float32)

    # Dense_0: nn.Linear(emb_dim, 2*ch), weight ~ default_init() (variance scaling,
    # fan_avg, uniform), bias zeros.
    fan_in, fan_out = emb_dim, 2 * C
    limit = float(np.sqrt(3.0 / ((fan_in + fan_out) / 2.0)))
    dense_w = jax.random.uniform(kw, (2 * C, emb_dim), jnp.float32, -limit, limit)
    dense_b = jnp.zeros((2 * C,), jnp.float32)

    out = get_act_norm_forward(x, emb, dense_w, dense_b)
    out = jax.block_until_ready(out)

    ref = _reference_forward(x, emb, dense_w, dense_b)
    np.testing.assert_allclose(np.asarray(out), np.asarray(ref), rtol=1e-5, atol=5e-5)

    # TODO(synk): norm='spade' (MySPADE conv path), is3d / n_frames>1, and the emb=None
    # (affine GroupNorm) branches are separate module configurations not exercised here.
    print("KERNEL_OK")
</pallas_src>

<mosaic_0001>
module attributes {stable_mosaic.version = 11 : i64} {
  func.func @_gn_film_silu_kernel(%arg0: i32, %arg1: i32, %arg2: memref<1x1x4x1x1xf32, #tpu.memory_space<vmem>>, %arg3: memref<1x1x4x1x1xf32, #tpu.memory_space<vmem>>, %arg4: memref<1x1x4x2x128xf32, #tpu.memory_space<vmem>>, %arg5: memref<1x1x4x2x128xf32, #tpu.memory_space<vmem>>) attributes {dimension_semantics = [#tpu.dimension_semantics<parallel>, #tpu.dimension_semantics<parallel>], iteration_bounds = array<i64: 2, 1>, scalar_prefetch = 0 : i64, scratch_operands = 0 : i64, tpu.core_type = #tpu.core_type<tc>, window_params = [{transform_indices = @transform_0, window_bounds = array<i64: 1, 1, 4, 1, 1>}, {transform_indices = @transform_1, window_bounds = array<i64: 1, 1, 4, 1, 1>}, {transform_indices = @transform_2, window_bounds = array<i64: 1, 1, 4, 2, 128>}, {transform_indices = @transform_3, window_bounds = array<i64: 1, 1, 4, 2, 128>}]} {
    %c0 = arith.constant 0 : index
    %c0_0 = arith.constant 0 : index
    %c0_1 = arith.constant 0 : index
    %c0_2 = arith.constant 0 : index
    %c0_3 = arith.constant 0 : index
    %0 = vector.load %arg4[%c0, %c0_0, %c0_1, %c0_2, %c0_3] : memref<1x1x4x2x128xf32, #tpu.memory_space<vmem>>, vector<1x1x4x2x128xf32>
    %1 = vector.shape_cast %0 : vector<1x1x4x2x128xf32> to vector<1x4x2x128xf32>
    %cst = arith.constant dense<0.000000e+00> : vector<1x128xf32>
    %2 = vector.multi_reduction <add>, %1, %cst [1, 2] : vector<1x4x2x128xf32> to vector<1x128xf32>
    %3 = vector.shape_cast %2 : vector<1x128xf32> to vector<1x1x1x128xf32>
    %4 = arith.mulf %1, %1 : vector<1x4x2x128xf32>
    %cst_4 = arith.constant dense<0.000000e+00> : vector<1x128xf32>
    %5 = vector.multi_reduction <add>, %4, %cst_4 [1, 2] : vector<1x4x2x128xf32> to vector<1x128xf32>
    %6 = vector.shape_cast %5 : vector<1x128xf32> to vector<1x1x1x128xf32>
    %cst_5 = arith.constant dense<0.000000e+00> : vector<1x1x1xf32>
    %7 = vector.multi_reduction <add>, %3, %cst_5 [3] : vector<1x1x1x128xf32> to vector<1x1x1xf32>
    %8 = vector.shape_cast %7 : vector<1x1x1xf32> to vector<1x1x1x1xf32>
    %cst_6 = arith.constant dense<0.000000e+00> : vector<1x1x1xf32>
    %9 = vector.multi_reduction <add>, %6, %cst_6 [3] : vector<1x1x1x128xf32> to vector<1x1x1xf32>
    %10 = vector.shape_cast %9 : vector<1x1x1xf32> to vector<1x1x1x1xf32>
    %cst_7 = arith.constant 9.765625E-4 : f32
    %11 = vector.broadcast %cst_7 : f32 to vector<1x1x1x1xf32>
    %12 = arith.mulf %8, %11 : vector<1x1x1x1xf32>
    %cst_8 = arith.constant 9.765625E-4 : f32
    %13 = vector.broadcast %cst_8 : f32 to vector<1x1x1x1xf32>
    %14 = arith.mulf %10, %13 : vector<1x1x1x1xf32>
    %15 = arith.mulf %12, %12 : vector<1x1x1x1xf32>
    %16 = arith.subf %14, %15 : vector<1x1x1x1xf32>
    %cst_9 = arith.constant 0.000000e+00 : f32
    %17 = vector.broadcast %cst_9 : f32 to vector<1x1x1x1xf32>
    %18 = arith.maximumf %16, %17 : vector<1x1x1x1xf32>
    %cst_10 = arith.constant 9.99999974E-6 : f32
    %19 = vector.broadcast %cst_10 : f32 to vector<1x1x1x1xf32>
    %20 = arith.addf %18, %19 : vector<1x1x1x1xf32>
    %21 = math.rsqrt %20 : vector<1x1x1x1xf32>
    %c0_11 = arith.constant 0 : index
    %c0_12 = arith.constant 0 : index
    %c0_13 = arith.constant 0 : index
    %c0_14 = arith.constant 0 : index
    %c0_15 = arith.constant 0 : index
    %22 = vector.load %arg2[%c0_11, %c0_12, %c0_13, %c0_14, %c0_15] : memref<1x1x4x1x1xf32, #tpu.memory_space<vmem>>, vector<1x1x4x1x1xf32>
    %23 = vector.shape_cast %22 : vector<1x1x4x1x1xf32> to vector<1x4x1x1xf32>
    %24 = vector.broadcast %21 : vector<1x1x1x1xf32> to vector<1x4x1x1xf32>
    %25 = arith.mulf %24, %23 : vector<1x4x1x1xf32>
    %c0_16 = arith.constant 0 : index
    %c0_17 = arith.constant 0 : index
    %c0_18 = arith.constant 0 : index
    %c0_19 = arith.constant 0 : index
    %c0_20 = arith.constant 0 : index
    %26 = vector.load %arg3[%c0_16, %c0_17, %c0_18, %c0_19, %c0_20] : memref<1x1x4x1x1xf32, #tpu.memory_space<vmem>>, vector<1x1x4x1x1xf32>
    %27 = vector.shape_cast %26 : vector<1x1x4x1x1xf32> to vector<1x4x1x1xf32>
    %28 = vector.broadcast %12 : vector<1x1x1x1xf32> to vector<1x4x1x1xf32>
    %29 = arith.mulf %28, %25 : vector<1x4x1x1xf32>
    %30 = arith.subf %27, %29 : vector<1x4x1x1xf32>
    %c0_21 = arith.constant 0 : index
    %c0_22 = arith.constant 0 : index
    %c0_23 = arith.constant 0 : index
    %c0_24 = arith.constant 0 : index
    %c0_25 = arith.constant 0 : index
    %31 = vector.load %arg4[%c0_21, %c0_22, %c0_23, %c0_24, %c0_25] : memref<1x1x4x2x128xf32, #tpu.memory_space<vmem>>, vector<1x1x4x2x128xf32>
    %32 = vector.shape_cast %31 : vector<1x1x4x2x128xf32> to vector<1x4x2x128xf32>
    %33 = vector.broadcast %25 : vector<1x4x1x1xf32> to vector<1x4x2x128xf32>
    %34 = arith.mulf %32, %33 : vector<1x4x2x128xf32>
    %35 = vector.broadcast %30 : vector<1x4x1x1xf32> to vector<1x4x2x128xf32>
    %36 = arith.addf %34, %35 : vector<1x4x2x128xf32>
    %37 = arith.negf %36 : vector<1x4x2x128xf32>
    %38 = math.exp %37 : vector<1x4x2x128xf32>
    %cst_26 = arith.constant 1.000000e+00 : f32
    %39 = vector.broadcast %cst_26 : f32 to vector<1x4x2x128xf32>
    %40 = arith.addf %39, %38 : vector<1x4x2x128xf32>
    %41 = arith.divf %39, %40 : vector<1x4x2x128xf32>
    %42 = arith.mulf %36, %41 : vector<1x4x2x128xf32>
    %c0_27 = arith.constant 0 : index
    %c0_28 = arith.constant 0 : index
    %c0_29 = arith.constant 0 : index
    %c0_30 = arith.constant 0 : index
    %c0_31 = arith.constant 0 : index
    %43 = vector.load %arg5[%c0_27, %c0_28, %c0_29, %c0_30, %c0_31] : memref<1x1x4x2x128xf32, #tpu.memory_space<vmem>>, vector<1x1x4x2x128xf32>
    %44 = vector.shape_cast %43 : vector<1x1x4x2x128xf32> to vector<1x4x2x128xf32>
    %45 = vector.shape_cast %42 : vector<1x4x2x128xf32> to vector<1x1x4x2x128xf32>
    tpu.vector_store %arg5[%c0_27, %c0_28, %c0_29, %c0_30, %c0_31], %45 {strides = array<i32>} : memref<1x1x4x2x128xf32, #tpu.memory_space<vmem>>, vector<1x1x4x2x128xf32>,
    return
  }
  func.func @transform_0(%arg0: i32, %arg1: i32) -> (i32, i32, i32, i32, i32) {
    %c0_i32 = arith.constant 0 : i32
    %c0_i32_0 = arith.constant 0 : i32
    %c0_i32_1 = arith.constant 0 : i32
    %c0_i32_2 = arith.constant 0 : i32
    return %arg0, %arg1, %c0_i32, %c0_i32_0, %c0_i32_1 : i32, i32, i32, i32, i32
  }
  func.func @transform_1(%arg0: i32, %arg1: i32) -> (i32, i32, i32, i32, i32) {
    %c0_i32 = arith.constant 0 : i32
    %c0_i32_0 = arith.constant 0 : i32
    %c0_i32_1 = arith.constant 0 : i32
    %c0_i32_2 = arith.constant 0 : i32
    return %arg0, %arg1, %c0_i32, %c0_i32_0, %c0_i32_1 : i32, i32, i32, i32, i32
  }
  func.func @transform_2(%arg0: i32, %arg1: i32) -> (i32, i32, i32, i32, i32) {
    %c0_i32 = arith.constant 0 : i32
    %c0_i32_0 = arith.constant 0 : i32
    %c0_i32_1 = arith.constant 0 : i32
    %c0_i32_2 = arith.constant 0 : i32
    return %arg0, %arg1, %c0_i32, %c0_i32_0, %c0_i32_1 : i32, i32, i32, i32, i32
  }
  func.func @transform_3(%arg0: i32, %arg1: i32) -> (i32, i32, i32, i32, i32) {
    %c0_i32 = arith.constant 0 : i32
    %c0_i32_0 = arith.constant 0 : i32
    %c0_i32_1 = arith.constant 0 : i32
    %c0_i32_2 = arith.constant 0 : i32
    return %arg0, %arg1, %c0_i32, %c0_i32_0, %c0_i32_1 : i32, i32, i32, i32, i32
  }
}

</mosaic_0001>

<llo_original>
// kernel: tpu_custom_call.1
$region0: #{tpu_custom_call.1}
  #allocation0 [shape = 'u32[]', space=smem, size = 0x4, offset = 0x4, fixed_abs, tag = 'smem constant byte address 0x4 - core index']
  #allocation1 [shape = 'u32[72,128]{1,0:T(1,128)}', space=vmem, size = 0x9000, scoped, tag = 'internal scratch']
  %s0 = inlined_call_operand.vmem [shape: f32[2,1,4,1,1], index: 0, kind: input, shape index: {}]
  %s1 = inlined_call_operand.vmem [shape: f32[2,1,4,1,1], index: 1, kind: input, shape index: {}]
  %s2 = inlined_call_operand.vmem [shape: f32[2,1,4,2,128], index: 2, kind: input, shape index: {}]
  %s3 = inlined_call_operand.hbm [shape: f32[2,1,4,2,128], index: 3, kind: output, shape index: {}]
  %s4 = sld [smem:[#allocation0]]
  $region45: #{tpu_custom_call.1} parent=0
    _
  %s6 = ssub.s32 1, %s4
  %s7 = scalar_select 0, %s6, %s4
  $region1: #{tpu_custom_call.1} parent=0
    #allocation2 [shape = 'u8[8192]{0}', space=vmem, size = 0x2000, scoped, tag = 'output window, operand 0']
    #allocation3 [shape = 's32[2]{0}', space=sflag, size = 0x8, scoped, tag = 'scoped memory for tpu_custom_call.1']
    %8 = vsyncpa [#allocation3], 0
    %s9 = scalar_lea.sflag [#allocation3], 1
    %10 = vsyncpa %s9, 0
    loop: start=0, step=1, limit=4
    $region2: #{tpu_custom_call.1} parent=1 // loop_pre_header
      _
    $region3: #{tpu_custom_call.1} parent=1 // loop_header
      %s12 = sphi 0, %s16
      %p13 = scmp.ge.s32.totalorder %s12, 4
      %s19 = sphi 0, %s31
      %s20 = sphi 0, %s27
      %s21 = sphi 0, %s19
      %s22 = sphi 0, %s20
      %s23 = sphi 0, %s21
      %s24 = sphi 0, %s22
      %s36 = sphi 0, %s38
      %s39 = sphi 0, %s36
      %s40 = sphi 0, %s39
      %s56 = sphi 0, %s40
      %s64 = sphi 0, %s66
      %s67 = sphi 0, %s64
      %s68 = sphi 0, %s67
      %s84 = sphi 0, %s68
      %s92 = sphi 0, %s94
      %s95 = sphi 0, %s92
      %s96 = sphi 0, %s95
      %s112 = sphi 0, %s96
      %s120 = sphi 0, %s122
      %s123 = sphi 0, %s120
      %s124 = sphi 0, %s123
      %s140 = sphi 0, %s124
    $region4: #{tpu_custom_call.1} parent=1 // loop_header_branch
      %15 = sbr.rel (%p13) target = $region8
    $region5: #{tpu_custom_call.1} parent=1 // loop_body
      %s17 = ssub.s32 %s12, 1
      %s18 = ssub.s32 %s12, 2
      %s25 = sadd.s32 1, %s20
      %p26 = scmp.ge.s32.totalorder %s25, 1
      %s27 = scalar_select %p26, 0, %s25
      %s28 = sadd.s32 1, %s19
      %s29 = scalar_select %p26, %s28, %s19
      %p30 = scmp.ge.s32.totalorder %s29, 2
      %s31 = scalar_select %p30, 0, %s29
      %s32 = ssub.s32 %s19, %s31
      %s33 = ssub.s32 %s20, %s27
      %s34 = sor.u32 %s32, %s33
      %p35 = scmp.eq.s32.totalorder %s34, 0
      %s37 = sadd.s32 %s36, 1
      %s38 = scalar_select %p35, %s36, %s37
      %p41 = pneg %p35
      %p42 = scmp.eq.s32.totalorder %s12, 1
      %p43 = por %p41, %p42
      %p44 = scmp.ne.s32.totalorder %s36, %s39
      %p45 = scmp.eq.s32.totalorder %s12, 0
      %p46 = por %p44, %p45
      %p47 = scmp.ne.s32.totalorder %s36, %s39
      %p48 = scmp.eq.s32.totalorder %s17, 1
      %p49 = por %p47, %p48
      %p50 = scmp.ne.s32.totalorder %s39, %s40
      %p51 = scmp.eq.s32.totalorder %s17, 0
      %p52 = por %p50, %p51
      %p53 = scmp.ne.s32.totalorder %s39, %s40
      %p54 = scmp.eq.s32.totalorder %s18, 1
      %p55 = por %p53, %p54
      %p57 = scmp.ne.s32.totalorder %s40, %s56
      %p58 = scmp.eq.s32.totalorder %s18, 0
      %p59 = por %p57, %p58
      %s60 = ssub.s32 %s19, %s31
      %s61 = ssub.s32 %s20, %s27
      %s62 = sor.u32 %s60, %s61
      %p63 = scmp.eq.s32.totalorder %s62, 0
      %s65 = sadd.s32 %s64, 1
      %s66 = scalar_select %p63, %s64, %s65
      %p69 = pneg %p63
      %p70 = scmp.eq.s32.totalorder %s12, 1
      %p71 = por %p69, %p70
      %p72 = scmp.ne.s32.totalorder %s64, %s67
      %p73 = scmp.eq.s32.totalorder %s12, 0
      %p74 = por %p72, %p73
      %p75 = scmp.ne.s32.totalorder %s64, %s67
      %p76 = scmp.eq.s32.totalorder %s17, 1
      %p77 = por %p75, %p76
      %p78 = scmp.ne.s32.totalorder %s67, %s68
      %p79 = scmp.eq.s32.totalorder %s17, 0
      %p80 = por %p78, %p79
      %p81 = scmp.ne.s32.totalorder %s67, %s68
      %p82 = scmp.eq.s32.totalorder %s18, 1
      %p83 = por %p81, %p82
      %p85 = scmp.ne.s32.totalorder %s68, %s84
      %p86 = scmp.eq.s32.totalorder %s18, 0
      %p87 = por %p85, %p86
      %s88 = ssub.s32 %s19, %s31
      %s89 = ssub.s32 %s20, %s27
      %s90 = sor.u32 %s88, %s89
      %p91 = scmp.eq.s32.totalorder %s90, 0
      %s93 = sadd.s32 %s92, 1
      %s94 = scalar_select %p91, %s92, %s93
      %p97 = pneg %p91
      %p98 = scmp.eq.s32.totalorder %s12, 1
      %p99 = por %p97, %p98
      %p100 = scmp.ne.s32.totalorder %s92, %s95
      %p101 = scmp.eq.s32.totalorder %s12, 0
      %p102 = por %p100, %p101
      %p103 = scmp.ne.s32.totalorder %s92, %s95
      %p104 = scmp.eq.s32.totalorder %s17, 1
      %p105 = por %p103, %p104
      %p106 = scmp.ne.s32.totalorder %s95, %s96
      %p107 = scmp.eq.s32.totalorder %s17, 0
      %p108 = por %p106, %p107
      %p109 = scmp.ne.s32.totalorder %s95, %s96
      %p110 = scmp.eq.s32.totalorder %s18, 1
      %p111 = por %p109, %p110
      %p113 = scmp.ne.s32.totalorder %s96, %s112
      %p114 = scmp.eq.s32.totalorder %s18, 0
      %p115 = por %p113, %p114
      %s116 = ssub.s32 %s19, %s31
      %s117 = ssub.s32 %s20, %s27
      %s118 = sor.u32 %s116, %s117
      %p119 = scmp.eq.s32.totalorder %s118, 0
      %s121 = sadd.s32 %s120, 1
      %s122 = scalar_select %p119, %s120, %s121
      %p125 = pneg %p119
      %p126 = scmp.eq.s32.totalorder %s12, 1
      %p127 = por %p125, %p126
      %p128 = scmp.ne.s32.totalorder %s120, %s123
      %p129 = scmp.eq.s32.totalorder %s12, 0
      %p130 = por %p128, %p129
      %p131 = scmp.ne.s32.totalorder %s120, %s123
      %p132 = scmp.eq.s32.totalorder %s17, 1
      %p133 = por %p131, %p132
      %p134 = scmp.ne.s32.totalorder %s123, %s124
      %p135 = scmp.eq.s32.totalorder %s17, 0
      %p136 = por %p134, %p135
      %p137 = scmp.ne.s32.totalorder %s123, %s124
      %p138 = scmp.eq.s32.totalorder %s18, 1
      %p139 = por %p137, %p138
      %p141 = scmp.ne.s32.totalorder %s124, %s140
      %p142 = scmp.eq.s32.totalorder %s18, 0
      %p143 = por %p141, %p142
      %p144 = scmp.le.s32.totalorder 1, %s12
      %p145 = scmp.lt.s32.totalorder %s12, 3
      %p146 = pnand %p144, %p145
      %p147 = pneg %p146
      // Predicated region
      $region9: #{tpu_custom_call.1} parent=5 // pred_check
        _
      $region10: #{tpu_custom_call.1} parent=5 // pred_check_branch
        %149 = sbr.rel (%p146) target = $region12
      $region11: #{tpu_custom_call.1} parent=5 // pred_region
        %s150 = ssub.s32 %s12, 1
      $region12: #{tpu_custom_call.1} parent=5 // pred_fallthru
        _
      %p151 = scmp.lt.s32.totalorder %s12, 2
      // Predicated region
      $region13: #{tpu_custom_call.1} parent=5 // pred_check
        %p152 = pneg %p151
      $region14: #{tpu_custom_call.1} parent=5 // pred_check_branch
        %154 = sbr.rel (%p152) target = $region16
      $region15: #{tpu_custom_call.1} parent=5 // pred_region
        // Predicated region
        $region17: #{tpu_custom_call.1} parent=15 // pred_check
          %p155 = pneg %p46
        $region18: #{tpu_custom_call.1} parent=15 // pred_check_branch
          %157 = sbr.rel (%p155) target = $region20
        $region19: #{tpu_custom_call.1} parent=15 // pred_region
          %p158 = scmp.lt.s32.totalorder %s19, 1
          %s159 = scalar_select %p158, %s19, 1
          %p160 = scmp.lt.s32.totalorder %s20, 0
          %s161 = scalar_select %p160, %s20, 0
          %s162 = smul.addr %s161, 4
          %s163 = smul.addr %s159, 4
          %s164 = sadd.s32 %s162, %s163
          %s165 = scalar_lea.vmem %s0, %s164
        $region20: #{tpu_custom_call.1} parent=15 // pred_fallthru
          _
        // Predicated region
        $region21: #{tpu_custom_call.1} parent=15 // pred_check
          %p166 = pneg %p74
        $region22: #{tpu_custom_call.1} parent=15 // pred_check_branch
          %168 = sbr.rel (%p166) target = $region24
        $region23: #{tpu_custom_call.1} parent=15 // pred_region
          %p169 = scmp.lt.s32.totalorder %s19, 1
          %s170 = scalar_select %p169, %s19, 1
          %p171 = scmp.lt.s32.totalorder %s20, 0
          %s172 = scalar_select %p171, %s20, 0
          %s173 = smul.addr %s172, 4
          %s174 = smul.addr %s170, 4
          %s175 = sadd.s32 %s173, %s174
          %s176 = scalar_lea.vmem %s1, %s175
        $region24: #{tpu_custom_call.1} parent=15 // pred_fallthru
          _
        // Predicated region
        $region25: #{tpu_custom_call.1} parent=15 // pred_check
          %p177 = pneg %p102
        $region26: #{tpu_custom_call.1} parent=15 // pred_check_branch
          %179 = sbr.rel (%p177) target = $region28
        $region27: #{tpu_custom_call.1} parent=15 // pred_region
          %p180 = scmp.lt.s32.totalorder %s19, 1
          %s181 = scalar_select %p180, %s19, 1
          %p182 = scmp.lt.s32.totalorder %s20, 0
          %s183 = scalar_select %p182, %s20, 0
          %s184 = smul.addr %s183, 4
          %s185 = smul.addr %s181, 4
          %s186 = sadd.s32 %s184, %s185
          %s187 = smul.addr %s186, 2
          %s188 = scalar_lea.vmem %s2, %s187
        $region28: #{tpu_custom_call.1} parent=15 // pred_fallthru
          _
      $region16: #{tpu_custom_call.1} parent=5 // pred_fallthru
        _
      %p189 = scmp.le.s32.totalorder 1, %s12
      %p190 = scmp.lt.s32.totalorder %s12, 3
      %p191 = pnand %p189, %p190
      %p192 = pneg %p191
      // Predicated region
      $region29: #{tpu_custom_call.1} parent=5 // pred_check
        _
      $region30: #{tpu_custom_call.1} parent=5 // pred_check_branch
        %194 = sbr.rel (%p191) target = $region32
      $region31: #{tpu_custom_call.1} parent=5 // pred_region
        %s195 = ssub.s32 %s12, 1
        %p196 = scmp.lt.s32.totalorder %s21, 1
        %s197 = scalar_select %p196, %s21, 1
        %p198 = scmp.lt.s32.totalorder %s22, 0
        %s199 = scalar_select %p198, %s22, 0
        %s200 = smul.addr %s199, 4
        %s201 = smul.addr %s197, 4
        %s202 = sadd.s32 %s200, %s201
        %s203 = scalar_lea.vmem %s0, %s202
        %p204 = pneg %p52
        %p205 = pneg %p49
        %p206 = scmp.lt.s32.totalorder %s21, 1
        %s207 = scalar_select %p206, %s21, 1
        %p208 = scmp.lt.s32.totalorder %s22, 0
        %s209 = scalar_select %p208, %s22, 0
        %s210 = smul.addr %s209, 4
        %s211 = smul.addr %s207, 4
        %s212 = sadd.s32 %s210, %s211
        %s213 = scalar_lea.vmem %s1, %s212
        %p214 = pneg %p80
        %p215 = pneg %p77
        %p216 = scmp.lt.s32.totalorder %s21, 1
        %s217 = scalar_select %p216, %s21, 1
        %p218 = scmp.lt.s32.totalorder %s22, 0
        %s219 = scalar_select %p218, %s22, 0
        %s220 = smul.addr %s219, 4
        %s221 = smul.addr %s217, 4
        %s222 = sadd.s32 %s220, %s221
        %s223 = smul.addr %s222, 2
        %s224 = scalar_lea.vmem %s2, %s223
        %p225 = pneg %p108
        %p226 = pneg %p105
        %p227 = pneg %p136
        %p228 = pneg %p133
        %s229 = sand.u32 %s123, 1
        %s230 = scalar_lea.sflag [#allocation3], %s229
        %s231 = sand.u32 %s123, 1
        %s232 = smul.addr %s231, 8
        %s233 = scalar_lea.vmem [#allocation2], %s232
        %p234 = scmp.lt.s32.totalorder %s21, 1
        %s235 = scalar_select %p234, %s21, 1
        %p236 = scmp.lt.s32.totalorder %s22, 0
        %s237 = scalar_select %p236, %s22, 0
        %s238 = smul.addr %s237, 4
        %s239 = smul.addr %s235, 4
        %s240 = sadd.s32 %s238, %s239
        %s241 = scalar_lea.vmem %s0, %s240
        %p242 = scmp.lt.s32.totalorder %s21, 1
        %s243 = scalar_select %p242, %s21, 1
        %p244 = scmp.lt.s32.totalorder %s22, 0
        %s245 = scalar_select %p244, %s22, 0
        %s246 = smul.addr %s245, 4
        %s247 = smul.addr %s243, 4
        %s248 = sadd.s32 %s246, %s247
        %s249 = scalar_lea.vmem %s1, %s248
        %p250 = scmp.lt.s32.totalorder %s21, 1
        %s251 = scalar_select %p250, %s21, 1
        %p252 = scmp.lt.s32.totalorder %s22, 0
        %s253 = scalar_select %p252, %s22, 0
        %s254 = smul.addr %s253, 4
        %s255 = smul.addr %s251, 4
        %s256 = sadd.s32 %s254, %s255
        %s257 = smul.addr %s256, 2
        %s258 = scalar_lea.vmem %s2, %s257
        %v259 = vld [vmem:[%s258] sm:$0x3]
        %v260 = vld [vmem:[%s258 + $0x2] sm:$0x3]
        %v261 = vld [vmem:[%s258 + $0x4] sm:$0x3]
        %v262 = vld [vmem:[%s258 + $0x6] sm:$0x3]
        %vm263 = vcmask 1041408
        %v264 = vsel %vm263, %v259, 0.0
        %v265 = vsel %vm263, %v260, 0.0
        %v266 = vadd.f32 %v264, %v265
        %v267 = vsel %vm263, %v261, 0.0
        %v268 = vadd.f32 %v266, %v267
        %v269 = vsel %vm263, %v262, 0.0
        %v270 = vadd.f32 %v268, %v269
        %v271 = vrot.slane %v270, 4
        %v272 = vadd.f32 %v270, %v271
        %v273 = vrot.slane %v272, 2
        %v274 = vadd.f32 %v272, %v273
        %v275 = vrot.slane %v274, 1
        %v276 = vadd.f32 %v274, %v275
        %v277 = vmul.f32 %v259, %v259
        %v278 = vmul.f32 %v260, %v260
        %v279 = vmul.f32 %v261, %v261
        %v280 = vmul.f32 %v262, %v262
        %v281 = vsel %vm263, %v277, 0.0
        %v282 = vsel %vm263, %v278, 0.0
        %v283 = vadd.f32 %v281, %v282
        %v284 = vsel %vm263, %v279, 0.0
        %v285 = vadd.f32 %v283, %v284
        %v286 = vsel %vm263, %v280, 0.0
        %v287 = vadd.f32 %v285, %v286
        %v288 = vrot.slane %v287, 4
        %v289 = vadd.f32 %v287, %v288
        %v290 = vrot.slane %v289, 2
        %v291 = vadd.f32 %v289, %v290
        %v292 = vrot.slane %v291, 1
        %v293 = vadd.f32 %v291, %v292
        %294 = vadd.xlane.f32.xlu0 %v276
        %v295 = vpop.xlane.xlu0 %294
        %296 = vadd.xlane.f32.xlu0 %v293
        %v297 = vpop.xlane.xlu0 %296
        %v298 = vmul.f32 %v295, 0.0009765625
        %v299 = vmul.f32 %v297, 0.0009765625
        %v300 = vmul.f32 %v298, %v298
        %v301 = vsub.f32 %v299, %v300
        %v302 = vmax.f32 %v301, 0.0
        %v303 = vadd.f32 %v302, 1e-05
        %v304 = vrsqrt.pop %v303
        %v305 = vmul.f32 %v304, %v303
        %v306 = vmul.f32 %v305, %v304
        %v307 = vmul.f32 0.5, %v306
        %v308 = vsub.f32 1.5, %v307
        %v309 = vmul.f32 %v304, %v308
        %vm310 = vweird.f32 %v303
        %vm311 = vweird.f32 %v304
        %vm312 = vmor %vm310, %vm311
        %v313 = vsel %vm312, %v304, %v309
        %v314 = vld [vmem:[%s241] sm:$0x1]
        %v315 = vld [vmem:[%s241 + $0x1] sm:$0x1]
        %v316 = vld [vmem:[%s241 + $0x2] sm:$0x1]
        %v317 = vld [vmem:[%s241 + $0x3] sm:$0x1]
        %v318 = vmul.f32 %v313, %v314
        %v319 = vmul.f32 %v313, %v315
        %v320 = vmul.f32 %v313, %v316
        %v321 = vmul.f32 %v313, %v317
        %v322 = vld [vmem:[%s249] sm:$0x1]
        %v323 = vld [vmem:[%s249 + $0x1] sm:$0x1]
        %v324 = vld [vmem:[%s249 + $0x2] sm:$0x1]
        %v325 = vld [vmem:[%s249 + $0x3] sm:$0x1]
        %v326 = vmul.f32 %v298, %v318
        %v327 = vmul.f32 %v298, %v319
        %v328 = vmul.f32 %v298, %v320
        %v329 = vmul.f32 %v298, %v321
        %v330 = vsub.f32 %v322, %v326
        %v331 = vsub.f32 %v323, %v327
        %v332 = vsub.f32 %v324, %v328
        %v333 = vsub.f32 %v325, %v329
        %v338 = vperm.slane %v318, 0
        %v339 = vperm.slane %v319, 0
        %v340 = vperm.slane %v320, 0
        %v341 = vperm.slane %v321, 0
        %342 = vset.pattern.permute.xlu0 0
        %343 = vperm.xlu0 %342, %v338
        %v344 = vpop.permute.xlu0 %343
        %346 = vset.pattern.permute.xlu0 0
        %347 = vperm.xlu0 %346, %v339
        %v348 = vpop.permute.xlu0 %347
        %350 = vset.pattern.permute.xlu0 0
        %351 = vperm.xlu0 %350, %v340
        %v352 = vpop.permute.xlu0 %351
        %354 = vset.pattern.permute.xlu0 0
        %355 = vperm.xlu0 %354, %v341
        %v356 = vpop.permute.xlu0 %355
        %v358 = vmul.f32 %v259, %v344
        %v359 = vmul.f32 %v260, %v348
        %v360 = vmul.f32 %v261, %v352
        %v361 = vmul.f32 %v262, %v356
        %v366 = vperm.slane %v330, 0
        %v367 = vperm.slane %v331, 0
        %v368 = vperm.slane %v332, 0
        %v369 = vperm.slane %v333, 0
        %370 = vset.pattern.permute.xlu0 0
        %371 = vperm.xlu0 %370, %v366
        %v372 = vpop.permute.xlu0 %371
        %374 = vset.pattern.permute.xlu0 0
        %375 = vperm.xlu0 %374, %v367
        %v376 = vpop.permute.xlu0 %375
        %378 = vset.pattern.permute.xlu0 0
        %379 = vperm.xlu0 %378, %v368
        %v380 = vpop.permute.xlu0 %379
        %382 = vset.pattern.permute.xlu0 0
        %383 = vperm.xlu0 %382, %v369
        %v384 = vpop.permute.xlu0 %383
        %v386 = vadd.f32 %v358, %v372
        %v387 = vadd.f32 %v359, %v376
        %v388 = vadd.f32 %v360, %v380
        %v389 = vadd.f32 %v361, %v384
        %v390 = vxor.u32 %v386, 2147483648
        %v391 = vxor.u32 %v387, 2147483648
        %v392 = vxor.u32 %v388, 2147483648
        %v393 = vxor.u32 %v389, 2147483648
        %v394 = vmul.f32 %v390, 1.442695
        %v395 = vpow.pop %v394
        %v396 = vmul.f32 %v391, 1.442695
        %v397 = vpow.pop %v396
        %v398 = vmul.f32 %v392, 1.442695
        %v399 = vpow.pop %v398
        %v400 = vmul.f32 %v393, 1.442695
        %v401 = vpow.pop %v400
        %v402 = vadd.f32 %v395, 1.0
        %v403 = vadd.f32 %v397, 1.0
        %v404 = vadd.f32 %v399, 1.0
        %v405 = vadd.f32 %v401, 1.0
        %v406 = vrcp.pop %v402
        %v407 = vmul.f32 %v402, %v406
        %v408 = vsub.f32 1.0, %v407
        %v409 = vmul.f32 %v406, %v408
        %v410 = vadd.f32 %v406, %v409
        %vm411 = vweird.f32 %v402
        %vm412 = vweird.f32 %v406
        %vm413 = vmor %vm411, %vm412
        %v414 = vsel %vm413, %v406, %v410
        %v415 = vand.u32 2147483647, %v402
        %vm416 = vcmp.eq.f32.partialorder %v415, 8.507059e+37
        %v417 = vand.u32 %v402, 2147483648
        %v418 = vor.u32 1.1754944e-38, %v417
        %v419 = vsel %vm416, %v418, %v414
        %v420 = vmul.f32 1.0, %v419
        %v421 = vrcp.pop %v403
        %v422 = vmul.f32 %v403, %v421
        %v423 = vsub.f32 1.0, %v422
        %v424 = vmul.f32 %v421, %v423
        %v425 = vadd.f32 %v421, %v424
        %vm426 = vweird.f32 %v403
        %vm427 = vweird.f32 %v421
        %vm428 = vmor %vm426, %vm427
        %v429 = vsel %vm428, %v421, %v425
        %v430 = vand.u32 2147483647, %v403
        %vm431 = vcmp.eq.f32.partialorder %v430, 8.507059e+37
        %v432 = vand.u32 %v403, 2147483648
        %v433 = vor.u32 1.1754944e-38, %v432
        %v434 = vsel %vm431, %v433, %v429
        %v435 = vmul.f32 1.0, %v434
        %v436 = vrcp.pop %v404
        %v437 = vmul.f32 %v404, %v436
        %v438 = vsub.f32 1.0, %v437
        %v439 = vmul.f32 %v436, %v438
        %v440 = vadd.f32 %v436, %v439
        %vm441 = vweird.f32 %v404
        %vm442 = vweird.f32 %v436
        %vm443 = vmor %vm441, %vm442
        %v444 = vsel %vm443, %v436, %v440
        %v445 = vand.u32 2147483647, %v404
        %vm446 = vcmp.eq.f32.partialorder %v445, 8.507059e+37
        %v447 = vand.u32 %v404, 2147483648
        %v448 = vor.u32 1.1754944e-38, %v447
        %v449 = vsel %vm446, %v448, %v444
        %v450 = vmul.f32 1.0, %v449
        %v451 = vrcp.pop %v405
        %v452 = vmul.f32 %v405, %v451
        %v453 = vsub.f32 1.0, %v452
        %v454 = vmul.f32 %v451, %v453
        %v455 = vadd.f32 %v451, %v454
        %vm456 = vweird.f32 %v405
        %vm457 = vweird.f32 %v451
        %vm458 = vmor %vm456, %vm457
        %v459 = vsel %vm458, %v451, %v455
        %v460 = vand.u32 2147483647, %v405
        %vm461 = vcmp.eq.f32.partialorder %v460, 8.507059e+37
        %v462 = vand.u32 %v405, 2147483648
        %v463 = vor.u32 1.1754944e-38, %v462
        %v464 = vsel %vm461, %v463, %v459
        %v465 = vmul.f32 1.0, %v464
        %v466 = vmul.f32 %v386, %v420
        %v467 = vmul.f32 %v387, %v435
        %v468 = vmul.f32 %v388, %v450
        %v469 = vmul.f32 %v389, %v465
        %470 = vst [vmem:[%s233] sm:$0x3] %v466
        %471 = vst [vmem:[%s233 + $0x2] sm:$0x3] %v467
        %472 = vst [vmem:[%s233 + $0x4] sm:$0x3] %v468
        %473 = vst [vmem:[%s233 + $0x6] sm:$0x3] %v469
        %s474 = sand.u32 %s123, 1
        %s475 = scalar_lea.sflag [#allocation3], %s474
        %s476 = sand.u32 %s123, 1
        %s477 = smul.addr %s476, 8
        %s478 = scalar_lea.vmem [#allocation2], %s477
        // Predicated region
        $region33: #{tpu_custom_call.1} parent=31 // pred_check
          %p479 = pneg %p133
        $region34: #{tpu_custom_call.1} parent=31 // pred_check_branch
          %481 = sbr.rel (%p479) target = $region36
        $region35: #{tpu_custom_call.1} parent=31 // pred_region
          %483 = vsyncadd %s475, 0
          %s484 = smul.addr %s22, 4
          %s485 = smul.addr %s21, 4
          %s486 = sadd.s32 %s484, %s485
          %s487 = smul.addr %s486, 2
          %s488 = scalar_lea.hbm %s3, %s487
          %s489 = sshll.u32 %s478, 4
          %s490 = int_to_ptr.vmem [resolvable:$true] %s489
          %s491 = sshll.u32 %s488, 4
          %s492 = int_to_ptr.hbm [resolvable:$true] %s491
          %497 = dma.vmem_to_hbm [thread:$0]  %s490, 128, %s492, %s475, 32, 32, 2
        $region36: #{tpu_custom_call.1} parent=31 // pred_fallthru
          _
      $region32: #{tpu_custom_call.1} parent=5 // pred_fallthru
        _
      %p498 = scmp.le.s32.totalorder 2, %s12
      // Predicated region
      $region37: #{tpu_custom_call.1} parent=5 // pred_check
        %p499 = pneg %p498
      $region38: #{tpu_custom_call.1} parent=5 // pred_check_branch
        %501 = sbr.rel (%p499) target = $region40
      $region39: #{tpu_custom_call.1} parent=5 // pred_region
        %s502 = ssub.s32 %s12, 2
        // Predicated region
        $region41: #{tpu_custom_call.1} parent=39 // pred_check
          %p503 = pneg %p139
        $region42: #{tpu_custom_call.1} parent=39 // pred_check_branch
          %505 = sbr.rel (%p503) target = $region44
        $region43: #{tpu_custom_call.1} parent=39 // pred_region
          %s506 = sand.u32 %s124, 1
          %s507 = scalar_lea.sflag [#allocation3], %s506
          %s508 = sand.u32 %s124, 1
          %s509 = smul.addr %s508, 8
          %s510 = scalar_lea.vmem [#allocation2], %s509
          %512 = dma.done %s507, 128
        $region44: #{tpu_custom_call.1} parent=39 // pred_fallthru
          _
      $region40: #{tpu_custom_call.1} parent=5 // pred_fallthru
        _
    $region6: #{tpu_custom_call.1} parent=1 // loop_footer
      %s16 = sadd.s32 1, %s12
    $region7: #{tpu_custom_call.1} parent=1 // loop_footer_branch
      %11 = sbr.rel target = $region3
    $region8: #{tpu_custom_call.1} parent=1 // loop_exit
      _
    %513 = vsyncpa [#allocation3], 1
    %s514 = scalar_lea.sflag [#allocation3], 1
    %515 = vsyncpa %s514, 1

</llo_original>
